<compile_context>
chip_gen: v6e
topology: v6e:2x2x1
jax: 0.10.0
libtpu: 0.0.40
codegen_flags: <defaults>
</compile_context>

<pallas_src>
import functools
import math

import jax
import jax.numpy as jnp
from jax.experimental import pallas as pl
from jax.experimental.pallas import tpu as pltpu


# ----------------------------- tiling helper -----------------------------

def _pick_tile(dim, target, align):
    """Largest tile <= target that divides `dim` and is a multiple of `align`;
    falls back to the full dim (a full-extent block is always legal)."""
    if dim <= target:
        return dim
    t = (target // align) * align
    while t >= align:
        if dim % t == 0:
            return t
        t -= align
    return dim


# ----------------------------- linear (tiled, bf16 MXU, f32 acc) ----------

def _linear_kernel(x_ref, w_ref, b_ref, o_ref, acc_ref, *, activation):
    k = pl.program_id(2)

    @pl.when(k == 0)
    def _():
        acc_ref[...] = jnp.zeros_like(acc_ref)

    acc_ref[...] += jnp.dot(x_ref[...], w_ref[...],
                            preferred_element_type=jnp.float32)

    @pl.when(k == pl.num_programs(2) - 1)
    def _():
        y = acc_ref[...] + b_ref[...]          # f32 elementwise (v5e-safe)
        if activation == "relu":
            y = jnp.maximum(y, 0.0)
        elif activation == "gelu":
            # TODO(synk): HF DistilBERT uses exact erf-GELU; tanh approximation
            # used here for robust Mosaic lowering (~1e-3 logit deviation).
            c = math.sqrt(2.0 / math.pi)
            y = 0.5 * y * (1.0 + jnp.tanh(c * (y + 0.044715 * y * y * y)))
        o_ref[...] = y.astype(o_ref.dtype)


def linear(x, w, b, activation=None, out_dtype=jnp.bfloat16):
    M, K = x.shape
    N = w.shape[1]
    TM = _pick_tile(M, 512, 8)
    TN = _pick_tile(N, 512, 128)
    TK = _pick_tile(K, 1024, 128)
    grid = (M // TM, N // TN, K // TK)
    return pl.pallas_call(
        functools.partial(_linear_kernel, activation=activation),
        out_shape=jax.ShapeDtypeStruct((M, N), out_dtype),
        grid_spec=pltpu.PrefetchScalarGridSpec(
            num_scalar_prefetch=0,
            grid=grid,
            in_specs=[
                pl.BlockSpec((TM, TK), lambda i, j, k: (i, k)),
                pl.BlockSpec((TK, TN), lambda i, j, k: (k, j)),
                pl.BlockSpec((1, TN), lambda i, j, k: (0, j)),
            ],
            out_specs=pl.BlockSpec((TM, TN), lambda i, j, k: (i, j)),
            scratch_shapes=[pltpu.VMEM((TM, TN), jnp.float32)],
        ),
        compiler_params=pltpu.CompilerParams(
            dimension_semantics=("parallel", "parallel", "arbitrary"),
            vmem_limit_bytes=32 * 1024 * 1024),
    )(x.astype(jnp.bfloat16), w.astype(jnp.bfloat16),
      b.reshape(1, N).astype(jnp.float32))


# ----------------------------- layernorm (row-tiled, fused residual) ------

def _ln_math(x, g, b, eps):
    mean = jnp.mean(x, axis=-1, keepdims=True)
    xc = x - mean
    var = jnp.mean(xc * xc, axis=-1, keepdims=True)
    inv = jax.lax.rsqrt(var + eps)
    return xc * inv * g + b


def _ln_kernel(x_ref, g_ref, b_ref, o_ref, *, eps):
    x = x_ref[...].astype(jnp.float32)
    o_ref[...] = _ln_math(x, g_ref[...], b_ref[...], eps).astype(o_ref.dtype)


def _ln_res_kernel(x_ref, r_ref, g_ref, b_ref, o_ref, *, eps):
    x = x_ref[...].astype(jnp.float32) + r_ref[...].astype(jnp.float32)
    o_ref[...] = _ln_math(x, g_ref[...], b_ref[...], eps).astype(o_ref.dtype)


def layernorm(x, gamma, beta, eps=1e-12, out_dtype=jnp.bfloat16):
    M, D = x.shape
    TM = _pick_tile(M, 512, 8)
    return pl.pallas_call(
        functools.partial(_ln_kernel, eps=eps),
        out_shape=jax.ShapeDtypeStruct((M, D), out_dtype),
        grid=(M // TM,),
        in_specs=[
            pl.BlockSpec((TM, D), lambda i: (i, 0)),
            pl.BlockSpec((1, D), lambda i: (0, 0)),
            pl.BlockSpec((1, D), lambda i: (0, 0)),
        ],
        out_specs=pl.BlockSpec((TM, D), lambda i: (i, 0)),
        compiler_params=pltpu.CompilerParams(
            dimension_semantics=("parallel",)),
    )(x, gamma.reshape(1, D).astype(jnp.float32),
      beta.reshape(1, D).astype(jnp.float32))


def layernorm_residual(x, res, gamma, beta, eps=1e-12, out_dtype=jnp.bfloat16):
    M, D = x.shape
    TM = _pick_tile(M, 512, 8)
    return pl.pallas_call(
        functools.partial(_ln_res_kernel, eps=eps),
        out_shape=jax.ShapeDtypeStruct((M, D), out_dtype),
        grid=(M // TM,),
        in_specs=[
            pl.BlockSpec((TM, D), lambda i: (i, 0)),
            pl.BlockSpec((TM, D), lambda i: (i, 0)),
            pl.BlockSpec((1, D), lambda i: (0, 0)),
            pl.BlockSpec((1, D), lambda i: (0, 0)),
        ],
        out_specs=pl.BlockSpec((TM, D), lambda i: (i, 0)),
        compiler_params=pltpu.CompilerParams(
            dimension_semantics=("parallel",)),
    )(x, res, gamma.reshape(1, D).astype(jnp.float32),
      beta.reshape(1, D).astype(jnp.float32))


# ----------------------------- attention (all heads per step, fused QKV) --

def _attn_kernel(qkv_ref, mask_ref, o_ref, *, n_heads, scale):
    qkv = qkv_ref[0]                      # (S, 3D) bf16
    m = mask_ref[0]                       # (1, S)  f32 key mask for this batch
    three_d = qkv.shape[-1]
    d = three_d // 3
    dh = d // n_heads
    neg = jnp.finfo(jnp.float32).min
    # additive key-mask bias, computed once for all heads (broadcast over rows)
    bias = jnp.where(m > 0.5, 0.0, neg)                  # (1, S) f32
    outs = []
    for h in range(n_heads):              # static unroll over heads
        qh = qkv[:, h * dh:(h + 1) * dh]                 # (S, Dh)
        kh = qkv[:, d + h * dh:d + (h + 1) * dh]         # (S, Dh)
        vh = qkv[:, 2 * d + h * dh:2 * d + (h + 1) * dh]  # (S, Dh)
        # contract last dims directly -> no explicit k.T materialization
        s = jax.lax.dot_general(
            qh, kh, dimension_numbers=(((1,), (1,)), ((), ())),
            preferred_element_type=jnp.float32)          # (S, S) f32
        s = s * scale + bias                             # mask padded keys
        s_max = jnp.max(s, axis=-1, keepdims=True)
        p = jnp.exp(s - s_max)
        denom = jnp.sum(p, axis=-1, keepdims=True)
        p = p * pl.reciprocal(denom, approx=True)        # EUP slot, ~free
        outs.append(jnp.dot(p.astype(vh.dtype), vh,
                            preferred_element_type=jnp.float32))
    o = jnp.concatenate(outs, axis=-1)                   # (S, D) lane-dense
    o_ref[0] = o.astype(o_ref.dtype)


def attention(qkv, mask, n_heads):
    B, S, three_d = qkv.shape
    D = three_d // 3
    Dh = D // n_heads
    scale = 1.0 / math.sqrt(Dh)
    return pl.pallas_call(
        functools.partial(_attn_kernel, n_heads=n_heads, scale=scale),
        out_shape=jax.ShapeDtypeStruct((B, S, D), jnp.bfloat16),
        grid=(B,),
        in_specs=[
            pl.BlockSpec((1, S, three_d), lambda b: (b, 0, 0)),
            pl.BlockSpec((1, 1, S), lambda b: (b, 0, 0)),
        ],
        out_specs=pl.BlockSpec((1, S, D), lambda b: (b, 0, 0)),
        compiler_params=pltpu.CompilerParams(
            dimension_semantics=("parallel",)),
    )(qkv, mask)


# ----------------------------- classification head (single fused kernel) --

def _head_kernel(cls_ref, w1_ref, b1_ref, w2_ref, b2_ref, o_ref):
    h = jnp.dot(cls_ref[...], w1_ref[...], preferred_element_type=jnp.float32)
    h = jnp.maximum(h + b1_ref[...], 0.0)                # pre_classifier + ReLU
    y = jnp.dot(h.astype(jnp.bfloat16), w2_ref[...],
                preferred_element_type=jnp.float32)
    o_ref[...] = (y + b2_ref[...]).astype(o_ref.dtype)


def classifier_head(cls, w1, b1, w2, b2):
    B, D = cls.shape
    L = w2.shape[1]
    return pl.pallas_call(
        _head_kernel,
        out_shape=jax.ShapeDtypeStruct((B, L), jnp.float32),
        grid=(1,),
        in_specs=[
            pl.BlockSpec((B, D), lambda i: (0, 0)),
            pl.BlockSpec((D, D), lambda i: (0, 0)),
            pl.BlockSpec((1, D), lambda i: (0, 0)),
            pl.BlockSpec((D, L), lambda i: (0, 0)),
            pl.BlockSpec((1, L), lambda i: (0, 0)),
        ],
        out_specs=pl.BlockSpec((B, L), lambda i: (0, 0)),
    )(cls.astype(jnp.bfloat16), w1.astype(jnp.bfloat16),
      b1.reshape(1, D).astype(jnp.float32), w2.astype(jnp.bfloat16),
      b2.reshape(1, L).astype(jnp.float32))


# ----------------------------- model glue -----------------------------

def init_params(key, vocab, max_pos, dim, n_layers, n_heads, ffn_dim, n_labels):
    cnt = [0]

    def nrm(shape, scale=0.02, dtype=jnp.float32):
        cnt[0] += 1
        return (scale * jax.random.normal(jax.random.fold_in(key, cnt[0]),
                                          shape, jnp.float32)).astype(dtype)

    params = {
        "word_emb": nrm((vocab, dim)),
        "pos_emb": nrm((max_pos, dim)),
        "emb_ln_g": jnp.ones((dim,), jnp.float32),
        "emb_ln_b": jnp.zeros((dim,), jnp.float32),
        "layers": [],
        "pre_w": nrm((dim, dim), dtype=jnp.bfloat16),
        "pre_b": jnp.zeros((dim,), jnp.float32),
        "cls_w": nrm((dim, n_labels), dtype=jnp.bfloat16),
        "cls_b": jnp.zeros((n_labels,), jnp.float32),
    }
    for _ in range(n_layers):
        params["layers"].append({
            # fused Q|K|V projection
            "qkv_w": nrm((dim, 3 * dim), dtype=jnp.bfloat16),
            "qkv_b": jnp.zeros((3 * dim,), jnp.float32),
            "o_w": nrm((dim, dim), dtype=jnp.bfloat16),
            "o_b": jnp.zeros((dim,), jnp.float32),
            "sa_ln_g": jnp.ones((dim,), jnp.float32),
            "sa_ln_b": jnp.zeros((dim,), jnp.float32),
            "ff1_w": nrm((dim, ffn_dim), dtype=jnp.bfloat16),
            "ff1_b": jnp.zeros((ffn_dim,), jnp.float32),
            "ff2_w": nrm((ffn_dim, dim), dtype=jnp.bfloat16),
            "ff2_b": jnp.zeros((dim,), jnp.float32),
            "out_ln_g": jnp.ones((dim,), jnp.float32),
            "out_ln_b": jnp.zeros((dim,), jnp.float32),
        })
    return params


def text_classifier_forward(params, input_ids, attention_mask, n_heads):
    B, S = input_ids.shape
    D = params["word_emb"].shape[1]

    # embeddings (gather is XLA glue) + layernorm (Pallas)
    pos = jnp.arange(S)
    x = params["word_emb"][input_ids] + params["pos_emb"][pos][None, :, :]
    x = layernorm(x.reshape(B * S, D), params["emb_ln_g"], params["emb_ln_b"])

    mask = attention_mask.astype(jnp.float32).reshape(B, 1, S)

    for layer in params["layers"]:
        # --- multi-head self-attention (fused QKV, fused output layout) ---
        qkv = linear(x, layer["qkv_w"], layer["qkv_b"])          # (B*S, 3D)
        ctx = attention(qkv.reshape(B, S, 3 * D), mask, n_heads)  # (B, S, D)
        attn_out = linear(ctx.reshape(B * S, D), layer["o_w"], layer["o_b"])
        x = layernorm_residual(attn_out, x, layer["sa_ln_g"], layer["sa_ln_b"])

        # --- feed-forward ---
        h = linear(x, layer["ff1_w"], layer["ff1_b"], activation="gelu")
        h = linear(h, layer["ff2_w"], layer["ff2_b"])
        x = layernorm_residual(h, x, layer["out_ln_g"], layer["out_ln_b"])

    # --- classification head: CLS -> pre_classifier(ReLU) -> classifier ---
    cls = x.reshape(B, S, D)[:, 0, :]                             # (B, D)
    logits = classifier_head(cls, params["pre_w"], params["pre_b"],
                             params["cls_w"], params["cls_b"])    # (B, labels)
    return logits


# ----------------------------- main -----------------------------

if __name__ == "__main__":
    B, S = 2, 8
    VOCAB, MAX_POS, DIM, LAYERS, HEADS, FFN, LABELS = 100, 32, 64, 2, 4, 128, 2

    key = jax.random.PRNGKey(0)
    params = init_params(key, VOCAB, MAX_POS, DIM, LAYERS, HEADS, FFN, LABELS)

    input_ids = jax.random.randint(jax.random.fold_in(key, 9999), (B, S),
                                   0, VOCAB, dtype=jnp.int32)
    attention_mask = jnp.array([[1, 1, 1, 1, 1, 1, 1, 1],
                                [1, 1, 1, 1, 1, 1, 0, 0]], dtype=jnp.int32)

    logits = text_classifier_forward(params, input_ids, attention_mask, HEADS)
    logits = jax.block_until_ready(logits)
    assert logits.shape == (B, LABELS) and logits.dtype == jnp.float32
    print("KERNEL_OK")
</pallas_src>

<mosaic_0001>
module attributes {stable_mosaic.version = 11 : i64} {
  func.func @_ln_kernel(%arg0: i32, %arg1: memref<16x64xf32, #tpu.memory_space<vmem>>, %arg2: memref<1x64xf32, #tpu.memory_space<vmem>>, %arg3: memref<1x64xf32, #tpu.memory_space<vmem>>, %arg4: memref<16x64xbf16, #tpu.memory_space<vmem>>) attributes {dimension_semantics = [#tpu.dimension_semantics<parallel>], iteration_bounds = array<i64: 1>, scalar_prefetch = 0 : i64, scratch_operands = 0 : i64, tpu.core_type = #tpu.core_type<tc>, window_params = [{transform_indices = @transform_0, window_bounds = array<i64: 16, 64>}, {pipeline_mode = #tpu.pipeline_mode<synchronous>, transform_indices = @transform_1, window_bounds = array<i64: 1, 64>}, {pipeline_mode = #tpu.pipeline_mode<synchronous>, transform_indices = @transform_2, window_bounds = array<i64: 1, 64>}, {transform_indices = @transform_3, window_bounds = array<i64: 16, 64>}]} {
    %c0 = arith.constant 0 : index
    %c0_0 = arith.constant 0 : index
    %0 = vector.load %arg1[%c0, %c0_0] : memref<16x64xf32, #tpu.memory_space<vmem>>, vector<16x64xf32>
    %c0_1 = arith.constant 0 : index
    %c0_2 = arith.constant 0 : index
    %1 = vector.load %arg2[%c0_1, %c0_2] : memref<1x64xf32, #tpu.memory_space<vmem>>, vector<1x64xf32>
    %c0_3 = arith.constant 0 : index
    %c0_4 = arith.constant 0 : index
    %2 = vector.load %arg3[%c0_3, %c0_4] : memref<1x64xf32, #tpu.memory_space<vmem>>, vector<1x64xf32>
    %cst = arith.constant dense<0.000000e+00> : vector<16xf32>
    %3 = vector.multi_reduction <add>, %0, %cst [1] : vector<16x64xf32> to vector<16xf32>
    %4 = vector.shape_cast %3 : vector<16xf32> to vector<16x1xf32>
    %cst_5 = arith.constant 6.400000e+01 : f32
    %5 = vector.broadcast %cst_5 : f32 to vector<16x1xf32>
    %6 = arith.divf %4, %5 : vector<16x1xf32>
    %7 = vector.broadcast %6 : vector<16x1xf32> to vector<16x64xf32>
    %8 = arith.subf %0, %7 : vector<16x64xf32>
    %9 = arith.mulf %8, %8 : vector<16x64xf32>
    %cst_6 = arith.constant dense<0.000000e+00> : vector<16xf32>
    %10 = vector.multi_reduction <add>, %9, %cst_6 [1] : vector<16x64xf32> to vector<16xf32>
    %11 = vector.shape_cast %10 : vector<16xf32> to vector<16x1xf32>
    %cst_7 = arith.constant 6.400000e+01 : f32
    %12 = vector.broadcast %cst_7 : f32 to vector<16x1xf32>
    %13 = arith.divf %11, %12 : vector<16x1xf32>
    %cst_8 = arith.constant 9.99999996E-13 : f32
    %14 = vector.broadcast %cst_8 : f32 to vector<16x1xf32>
    %15 = arith.addf %13, %14 : vector<16x1xf32>
    %16 = math.rsqrt %15 : vector<16x1xf32>
    %17 = vector.broadcast %16 : vector<16x1xf32> to vector<16x64xf32>
    %18 = arith.mulf %8, %17 : vector<16x64xf32>
    %19 = vector.broadcast %1 : vector<1x64xf32> to vector<16x64xf32>
    %20 = arith.mulf %18, %19 : vector<16x64xf32>
    %21 = vector.broadcast %2 : vector<1x64xf32> to vector<16x64xf32>
    %22 = arith.addf %20, %21 : vector<16x64xf32>
    %23 = arith.truncf %22 : vector<16x64xf32> to vector<16x64xbf16>
    %c0_9 = arith.constant 0 : index
    %c0_10 = arith.constant 0 : index
    %24 = vector.load %arg4[%c0_9, %c0_10] : memref<16x64xbf16, #tpu.memory_space<vmem>>, vector<16x64xbf16>
    tpu.vector_store %arg4[%c0_9, %c0_10], %23 {strides = array<i32>} : memref<16x64xbf16, #tpu.memory_space<vmem>>, vector<16x64xbf16>,
    return
  }
  func.func @transform_0(%arg0: i32) -> (i32, i32) {
    %c0_i32 = arith.constant 0 : i32
    %c0_i32_0 = arith.constant 0 : i32
    return %arg0, %c0_i32 : i32, i32
  }
  func.func @transform_1(%arg0: i32) -> (i32, i32) {
    %c0_i32 = arith.constant 0 : i32
    %c0_i32_0 = arith.constant 0 : i32
    %c0_i32_1 = arith.constant 0 : i32
    return %c0_i32, %c0_i32_0 : i32, i32
  }
  func.func @transform_2(%arg0: i32) -> (i32, i32) {
    %c0_i32 = arith.constant 0 : i32
    %c0_i32_0 = arith.constant 0 : i32
    %c0_i32_1 = arith.constant 0 : i32
    return %c0_i32, %c0_i32_0 : i32, i32
  }
  func.func @transform_3(%arg0: i32) -> (i32, i32) {
    %c0_i32 = arith.constant 0 : i32
    %c0_i32_0 = arith.constant 0 : i32
    return %arg0, %c0_i32 : i32, i32
  }
}

</mosaic_0001>

<llo_original>
// kernel: tpu_custom_call.1
$region0: #{tpu_custom_call.1}
  #allocation0 [shape = 'u32[]', space=smem, size = 0x4, offset = 0x4, fixed_abs, tag = 'smem constant byte address 0x4 - core index']
  #allocation1 [shape = 'u32[144,128]{1,0:T(1,128)}', space=vmem, size = 0x12000, scoped, tag = 'internal scratch']
  %s0 = inlined_call_operand.hbm [shape: f32[16,64], index: 0, kind: input, shape index: {}]
  %s1 = inlined_call_operand.vmem [shape: f32[1,64], index: 1, kind: input, shape index: {}]
  %s2 = inlined_call_operand.vmem [shape: f32[1,64], index: 2, kind: input, shape index: {}]
  %s3 = inlined_call_operand.hbm [shape: bf16[16,64], index: 3, kind: output, shape index: {}]
  %s4 = sld [smem:[#allocation0]]
  $region26: #{tpu_custom_call.1} parent=0
    _
  %s6 = ssub.s32 1, %s4
  %s7 = scalar_select 0, %s6, %s4
  $region1: #{tpu_custom_call.1} parent=0
    #allocation2 [shape = 'u8[8192]{0}', space=vmem, size = 0x2000, scoped, tag = 'input window, operand 0, single buffered']
    #allocation3 [shape = 's32[1]{0}', space=sflag, size = 0x4, scoped, tag = 'scoped memory for tpu_custom_call.1']
    #allocation4 [shape = 's32[1]{0}', space=sflag, size = 0x4, scoped, tag = 'scoped memory for tpu_custom_call.1']
    #allocation5 [shape = 'u8[4096]{0}', space=vmem, size = 0x1000, scoped, tag = 'output window, operand 0, single buffered']
    %8 = vsyncpa [#allocation3], 0
    %9 = vsyncpa [#allocation4], 0
    // Predicated region
    $region2: #{tpu_custom_call.1} parent=1 // pred_check
      _
    $region3: #{tpu_custom_call.1} parent=1 // pred_check_branch
      %11 = sbr.rel (0) target = $region5
    $region4: #{tpu_custom_call.1} parent=1 // pred_region
      %s13 = ssub.s32 256, 256
      %14 = vsyncadd [#allocation3], %s13
      %s15 = sshll.u32 [#allocation2], 4
      %s16 = int_to_ptr.vmem [resolvable:$true] %s15
      %21 = dma.hbm_to_vmem [thread:$0]  %s0, 256, %s16, [#allocation3], 128, 128, 8
    $region5: #{tpu_custom_call.1} parent=1 // pred_fallthru
      _
    // Predicated region
    $region6: #{tpu_custom_call.1} parent=1 // pred_check
      _
    $region7: #{tpu_custom_call.1} parent=1 // pred_check_branch
      %23 = sbr.rel (0) target = $region9
    $region8: #{tpu_custom_call.1} parent=1 // pred_region
      _
    $region9: #{tpu_custom_call.1} parent=1 // pred_fallthru
      _
    // Predicated region
    $region10: #{tpu_custom_call.1} parent=1 // pred_check
      _
    $region11: #{tpu_custom_call.1} parent=1 // pred_check_branch
      %25 = sbr.rel (0) target = $region13
    $region12: #{tpu_custom_call.1} parent=1 // pred_region
      _
    $region13: #{tpu_custom_call.1} parent=1 // pred_fallthru
      _
    // Predicated region
    $region14: #{tpu_custom_call.1} parent=1 // pred_check
      _
    $region15: #{tpu_custom_call.1} parent=1 // pred_check_branch
      %27 = sbr.rel (0) target = $region17
    $region16: #{tpu_custom_call.1} parent=1 // pred_region
      %28 = dma.done [#allocation3], 256
    $region17: #{tpu_custom_call.1} parent=1 // pred_fallthru
      _
    %v29 = vld [vmem:[#allocation2] sm:$0xff]
    %v30 = vld [vmem:[#allocation2 + $0x8] sm:$0xff]
    %v31 = vld [vmem:[%s1] sm:$0x1]
    %v32 = vld [vmem:[%s2] sm:$0x1]
    %vm33 = vcmask 523264
    %v34 = vsel %vm33, %v29, 0.0
    %35 = vadd.xlane.f32.xlu0 %v34
    %v36 = vpop.xlane.xlu0 %35
    %v37 = vsel %vm33, %v30, 0.0
    %38 = vadd.xlane.f32.xlu0 %v37
    %v39 = vpop.xlane.xlu0 %38
    %v40 = vrcp.pop 64.0
    %v41 = vmul.f32 %v36, %v40
    %v42 = vmul.f32 %v39, %v40
    %v43 = vsub.f32 %v29, %v41
    %v44 = vsub.f32 %v30, %v42
    %v45 = vmul.f32 %v43, %v43
    %v46 = vmul.f32 %v44, %v44
    %v47 = vsel %vm33, %v45, 0.0
    %48 = vadd.xlane.f32.xlu0 %v47
    %v49 = vpop.xlane.xlu0 %48
    %v50 = vsel %vm33, %v46, 0.0
    %51 = vadd.xlane.f32.xlu0 %v50
    %v52 = vpop.xlane.xlu0 %51
    %v53 = vmul.f32 %v49, %v40
    %v54 = vmul.f32 %v52, %v40
    %v55 = vadd.f32 %v53, 1e-12
    %v56 = vadd.f32 %v54, 1e-12
    %v57 = vrsqrt.pop %v55
    %v58 = vrsqrt.pop %v56
    %v59 = vmul.f32 %v43, %v57
    %v60 = vmul.f32 %v44, %v58
    %v62 = vlaneseq
    %v63 = vshrl.u32 %v62, 7
    %v64 = vsub.s32 0, %v63
    %v65 = vrot.slane %v31, %v64
    %v67 = vmul.f32 %v59, %v65
    %v68 = vmul.f32 %v60, %v65
    %v70 = vlaneseq
    %v71 = vshrl.u32 %v70, 7
    %v72 = vsub.s32 0, %v71
    %v73 = vrot.slane %v32, %v72
    %v75 = vadd.f32 %v67, %v73
    %v76 = vadd.f32 %v68, %v73
    %v77 = vpack.c.bf16 %v76, %v75
    %v79 = vunpack.c.l.b16 %v77
    %v80 = vunpack.c.h.b16 %v77
    %v81 = vpack.c.b16 %v79, %v79
    %v82 = vpack.c.b16 %v80, %v80
    %vm85 = vcmask 519168
    %86 = vst.msk [vmem:[#allocation5] sm:$0xf] %vm85, %v81
    %87 = vst.msk [vmem:[#allocation5 + $0x4] sm:$0xf] %vm85, %v82
    // Predicated region
    $region18: #{tpu_custom_call.1} parent=1 // pred_check
      _
    $region19: #{tpu_custom_call.1} parent=1 // pred_check_branch
      %89 = sbr.rel (0) target = $region21
    $region20: #{tpu_custom_call.1} parent=1 // pred_region
      %s91 = ssub.s32 128, 128
      %92 = vsyncadd [#allocation4], %s91
      %s93 = sshll.u32 [#allocation5], 4
      %s94 = int_to_ptr.vmem [resolvable:$true] %s93
      %99 = dma.vmem_to_hbm [thread:$0]  %s94, 128, %s3, [#allocation4], 64, 64, 4
    $region21: #{tpu_custom_call.1} parent=1 // pred_fallthru
      _
    // Predicated region
    $region22: #{tpu_custom_call.1} parent=1 // pred_check
      _
    $region23: #{tpu_custom_call.1} parent=1 // pred_check_branch
      %101 = sbr.rel (0) target = $region25
    $region24: #{tpu_custom_call.1} parent=1 // pred_region
      %102 = dma.done [#allocation4], 128
    $region25: #{tpu_custom_call.1} parent=1 // pred_fallthru
      _
    %103 = vsyncpa [#allocation3], 1
    %104 = vsyncpa [#allocation4], 1

</llo_original>
